<compile_context>
chip_gen: v6e
topology: v6e:2x2x1
jax: 0.10.0
libtpu: 0.0.40
codegen_flags: <defaults>
</compile_context>

<pallas_src>
import functools

import jax
import jax.numpy as jnp
from jax import lax
from jax.experimental import pallas as pl
from jax.experimental.pallas import tpu as pltpu


# ----------------------------------------------------------------------------
# helpers
# ----------------------------------------------------------------------------
def _round_up(x, m):
    return (x + m - 1) // m * m


@functools.lru_cache(maxsize=None)
def _vmem_limit_bytes():
    """Generation-aware scoped-VMEM request for the matmul kernels."""
    cap = None
    try:
        info = pltpu.get_tpu_info()
        cap = getattr(info, "vmem_capacity_bytes", None)
    except Exception:
        cap = None
    if not cap:
        return 40 * 1024 * 1024            # safe everywhere
    if cap <= 64 * 1024 * 1024:            # v7x-class: 64 MiB physical per TC
        return 44 * 1024 * 1024
    return 96 * 1024 * 1024                # v5e / v6e: 128 MiB physical


class KeyGen:
    def __init__(self, key):
        self._key = key

    def __call__(self):
        self._key, k = jax.random.split(self._key)
        return k


# ----------------------------------------------------------------------------
# Pallas kernels
# ----------------------------------------------------------------------------
def _mm_bias_act_kernel(a_ref, b_ref, bias_ref, o_ref, *, apply_relu):
    y = jnp.dot(a_ref[...], b_ref[...], preferred_element_type=jnp.float32)
    y = y + bias_ref[...]
    if apply_relu:
        y = jnp.maximum(y, 0.0)
    o_ref[...] = y.astype(o_ref.dtype)


def _mm_bias_res_act_kernel(a_ref, b_ref, bias_ref, res_ref, o_ref, *, apply_relu):
    y = jnp.dot(a_ref[...], b_ref[...], preferred_element_type=jnp.float32)
    y = y + bias_ref[...] + res_ref[...].astype(jnp.float32)
    if apply_relu:
        y = jnp.maximum(y, 0.0)
    o_ref[...] = y.astype(o_ref.dtype)


def _choose_tiles(M, K, N):
    """tm: keep the MXU's 256 rows fed (pad M instead of shrinking tm); cap at 256 for
    the K=4608 layers so the double-buffered working set fits v7x's 64 MiB VMEM.
    tn: lane-dense 256 where the layer width allows (N=64/128 layers equal full N)."""
    tn = 256 if N > 256 else N
    cands = [256] if K > 2400 else [512, 256]
    if M <= min(cands):
        tm = max(_round_up(M, 8), 8)
    else:
        tm = min(cands, key=lambda t: (_round_up(M, t), -t))
    return tm, tn


def matmul_fused(a, b, bias, residual=None, apply_relu=True,
                 out_dtype=jnp.bfloat16):
    """act((a @ b) + bias [+ residual]).

    a: (M, K) bf16, b: (K, N) bf16, bias: (1, N) f32, residual: (M, N) or None.
    Single full-K block per grid step (no accumulator scratch, output stored once).
    M is padded to a tm multiple; grid is (j, i) so the weight block stays VMEM-resident
    across the inner i sweep.
    """
    M, K = a.shape
    K2, N = b.shape
    assert K == K2 and bias.shape == (1, N)

    tm, tn = _choose_tiles(M, K, N)
    Mp = _round_up(M, tm)
    if Mp != M:
        a = jnp.pad(a, ((0, Mp - M), (0, 0)))
        if residual is not None:
            residual = jnp.pad(residual, ((0, Mp - M), (0, 0)))
    grid = (N // tn, Mp // tm)  # j outer, i inner -> weight resident across i

    in_specs = [
        pl.BlockSpec((tm, K), lambda j, i: (i, 0)),
        pl.BlockSpec((K, tn), lambda j, i: (0, j)),
        pl.BlockSpec((1, tn), lambda j, i: (0, j)),
    ]
    args = [a, b, bias]
    if residual is not None:
        assert residual.shape == (Mp, N)
        in_specs.append(pl.BlockSpec((tm, tn), lambda j, i: (i, j)))
        args.append(residual)
        kernel = functools.partial(_mm_bias_res_act_kernel, apply_relu=apply_relu)
    else:
        kernel = functools.partial(_mm_bias_act_kernel, apply_relu=apply_relu)

    gj = N // tn
    bytes_accessed = 2 * (Mp * K * gj + K * N + Mp * N) + 4 * N
    if residual is not None:
        bytes_accessed += 2 * Mp * N

    out = pl.pallas_call(
        kernel,
        out_shape=jax.ShapeDtypeStruct((Mp, N), out_dtype),
        grid_spec=pltpu.PrefetchScalarGridSpec(
            num_scalar_prefetch=0,
            grid=grid,
            in_specs=in_specs,
            out_specs=pl.BlockSpec((tm, tn), lambda j, i: (i, j))),
        compiler_params=pltpu.CompilerParams(
            dimension_semantics=("parallel", "parallel"),
            vmem_limit_bytes=_vmem_limit_bytes()),
        cost_estimate=pl.CostEstimate(flops=2 * Mp * N * K, transcendentals=0,
                                      bytes_accessed=bytes_accessed),
    )(*args)
    return out[:M] if Mp != M else out


def _maxpool9_kernel(ee_ref, eo_ref, oe_ref, oo_ref, o_ref):
    _, Ho, Wo, _ = o_ref.shape
    m = ee_ref[:, 0:Ho, 0:Wo, :]
    m = jnp.maximum(m, ee_ref[:, 0:Ho, 1:Wo + 1, :])
    m = jnp.maximum(m, ee_ref[:, 1:Ho + 1, 0:Wo, :])
    m = jnp.maximum(m, ee_ref[:, 1:Ho + 1, 1:Wo + 1, :])
    m = jnp.maximum(m, eo_ref[:, 0:Ho, 0:Wo, :])
    m = jnp.maximum(m, eo_ref[:, 1:Ho + 1, 0:Wo, :])
    m = jnp.maximum(m, oe_ref[:, 0:Ho, 0:Wo, :])
    m = jnp.maximum(m, oe_ref[:, 0:Ho, 1:Wo + 1, :])
    m = jnp.maximum(m, oo_ref[:, 0:Ho, 0:Wo, :])
    o_ref[...] = m


def maxpool_3x3_s2(x):
    """NHWC 3x3 stride-2 max pool, padding 1 (even H/W). Phase decomposition + a
    batch-parallel grid: per-step VMEM is a few MiB (pipelined, safe at real batch
    sizes, shardable across v7x's two TensorCores)."""
    B, H, W, C = x.shape
    Ho, Wo = H // 2, W // 2
    xp = jnp.pad(x, ((0, 0), (1, 1), (1, 1), (0, 0)),
                 constant_values=-jnp.inf)
    ee = xp[:, 0::2, 0::2, :]
    eo = xp[:, 0::2, 1::2, :]
    oe = xp[:, 1::2, 0::2, :]
    oo = xp[:, 1::2, 1::2, :]
    Hh, Wh = Ho + 1, Wo + 1
    phase_spec = pl.BlockSpec((1, Hh, Wh, C), lambda b: (b, 0, 0, 0))
    return pl.pallas_call(
        _maxpool9_kernel,
        out_shape=jax.ShapeDtypeStruct((B, Ho, Wo, C), x.dtype),
        grid=(B,),
        in_specs=[phase_spec, phase_spec, phase_spec, phase_spec],
        out_specs=pl.BlockSpec((1, Ho, Wo, C), lambda b: (b, 0, 0, 0)),
        compiler_params=pltpu.CompilerParams(
            dimension_semantics=("parallel",)),
    )(ee, eo, oe, oo)


def _global_avgpool_kernel(x_ref, o_ref):
    o_ref[...] = jnp.mean(x_ref[...].astype(jnp.float32), axis=1, keepdims=True)


def global_avgpool_pallas(x):
    """x: (B, HW, C) -> (B, C) f32, batch-parallel grid."""
    B, HW, C = x.shape
    out = pl.pallas_call(
        _global_avgpool_kernel,
        out_shape=jax.ShapeDtypeStruct((B, 1, C), jnp.float32),
        grid=(B,),
        in_specs=[pl.BlockSpec((1, HW, C), lambda b: (b, 0, 0))],
        out_specs=pl.BlockSpec((1, 1, C), lambda b: (b, 0, 0)),
        compiler_params=pltpu.CompilerParams(
            dimension_semantics=("parallel",)),
    )(x)
    return out.reshape(B, C)


# ----------------------------------------------------------------------------
# glue: im2col (bf16), fused conv+bn(+res)(+relu), basic block, resnet18 trunk
# ----------------------------------------------------------------------------
def im2col(x, kh, kw, stride, pad):
    """x: (B, H, W, C) NHWC bf16 -> (B*Ho*Wo, kh*kw*C). 1x1 convs avoid duplication."""
    B, H, W, C = x.shape
    xp = jnp.pad(x, ((0, 0), (pad, pad), (pad, pad), (0, 0))) if pad else x
    Hp, Wp = H + 2 * pad, W + 2 * pad
    Ho = (Hp - kh) // stride + 1
    Wo = (Wp - kw) // stride + 1
    if kh == 1 and kw == 1:
        cols = xp[:, 0:stride * Ho:stride, 0:stride * Wo:stride, :]
        return cols.reshape(B * Ho * Wo, C), Ho, Wo
    patches = [xp[:, di:di + stride * Ho:stride, dj:dj + stride * Wo:stride, :]
               for di in range(kh) for dj in range(kw)]
    cols = jnp.stack(patches, axis=3)          # (B, Ho, Wo, kh*kw, C)
    return cols.reshape(B * Ho * Wo, kh * kw * C), Ho, Wo


def conv_bn(x, w, bn, stride, pad, apply_relu, residual=None):
    """Conv + BN folded into weights/bias (+ residual) (+ ReLU), one fused matmul."""
    B = x.shape[0]
    kh, kw, cin, cout = w.shape
    cols, Ho, Wo = im2col(x, kh, kw, stride, pad)
    scale = bn['gamma'] * lax.rsqrt(bn['var'] + 1e-5)
    shift = bn['beta'] - bn['mean'] * scale
    w_folded = (w.reshape(kh * kw * cin, cout) * scale[None, :]).astype(jnp.bfloat16)
    bias = shift.reshape(1, cout).astype(jnp.float32)
    res = None if residual is None else residual.reshape(B * Ho * Wo, cout)
    y = matmul_fused(cols, w_folded, bias, residual=res, apply_relu=apply_relu)
    return y.reshape(B, Ho, Wo, cout)


def basic_block(x, p, stride):
    if 'down_conv' in p:
        shortcut = conv_bn(x, p['down_conv'], p['down_bn'], stride, 0,
                           apply_relu=False)
    else:
        shortcut = x
    out = conv_bn(x, p['conv1'], p['bn1'], stride, 1, apply_relu=True)
    # residual add + ReLU fused into the second conv's matmul epilogue
    out = conv_bn(out, p['conv2'], p['bn2'], 1, 1, apply_relu=True,
                  residual=shortcut)
    return out


def feature_extractor(image_nchw, params):
    """ResNet18 without the final fc: (B, 3, H, W) -> (B, 512) f32."""
    x = jnp.transpose(image_nchw, (0, 2, 3, 1)).astype(jnp.bfloat16)  # NHWC bf16
    x = conv_bn(x, params['conv1'], params['bn1'], stride=2, pad=3,
                apply_relu=True)
    x = maxpool_3x3_s2(x)
    for li, (_, stride) in enumerate([(64, 1), (128, 2), (256, 2), (512, 2)],
                                     start=1):
        blocks = params[f'layer{li}']
        x = basic_block(x, blocks[0], stride)
        x = basic_block(x, blocks[1], 1)
    feats = global_avgpool_pallas(x.reshape(x.shape[0], -1, x.shape[3]))
    return feats  # == .view(B, -1) since pooled spatial is 1x1


# ----------------------------------------------------------------------------
# deterministic synthetic parameters (ResNet18 shapes)
# ----------------------------------------------------------------------------
def init_resnet18_params(key):
    kg = KeyGen(key)

    def conv(kh, kw, cin, cout):
        fan_in = kh * kw * cin
        return (jax.random.normal(kg(), (kh, kw, cin, cout), jnp.float32)
                * (2.0 / fan_in) ** 0.5)

    def bn(c):
        return dict(
            gamma=1.0 + 0.1 * jax.random.normal(kg(), (c,), jnp.float32),
            beta=0.05 * jax.random.normal(kg(), (c,), jnp.float32),
            mean=0.05 * jax.random.normal(kg(), (c,), jnp.float32),
            var=jax.random.uniform(kg(), (c,), jnp.float32, 0.5, 1.5),
        )

    params = dict(conv1=conv(7, 7, 3, 64), bn1=bn(64))
    cin = 64
    for li, (cout, stride) in enumerate([(64, 1), (128, 2), (256, 2), (512, 2)],
                                        start=1):
        blocks = []
        for bi in range(2):
            s = stride if bi == 0 else 1
            in_c = cin if bi == 0 else cout
            blk = dict(conv1=conv(3, 3, in_c, cout), bn1=bn(cout),
                       conv2=conv(3, 3, cout, cout), bn2=bn(cout))
            if s != 1 or in_c != cout:
                blk['down_conv'] = conv(1, 1, in_c, cout)
                blk['down_bn'] = bn(cout)
            blocks.append(blk)
        params[f'layer{li}'] = blocks
        cin = cout
    return params


# ----------------------------------------------------------------------------
# main
# ----------------------------------------------------------------------------
if __name__ == "__main__":
    root = jax.random.PRNGKey(0)
    pkey, xkey = jax.random.split(root)

    # small but structurally valid input: B=2, C=3, H=W=64 (NCHW like PyTorch)
    x = jax.random.normal(xkey, (2, 3, 64, 64), jnp.float32)
    params = init_resnet18_params(pkey)

    # sanity-check the fused Pallas matmul (bf16 operands, f32 accumulation),
    # including a non-tile-multiple M to exercise the padding path
    a = jax.random.normal(jax.random.PRNGKey(1), (200, 256), jnp.float32).astype(jnp.bfloat16)
    b = jax.random.normal(jax.random.PRNGKey(2), (256, 128), jnp.float32).astype(jnp.bfloat16)
    zero_bias = jnp.zeros((1, 128), jnp.float32)
    got = matmul_fused(a, b, zero_bias, apply_relu=False).astype(jnp.float32)
    ref = jnp.dot(a.astype(jnp.float32), b.astype(jnp.float32))
    assert got.shape == ref.shape
    assert bool(jnp.allclose(got, ref, atol=5e-2, rtol=2e-2))

    feats = jax.jit(feature_extractor)(x, params)
    feats = jax.block_until_ready(feats)

    assert feats.shape == (2, 512), feats.shape
    assert bool(jnp.all(jnp.isfinite(feats)))
    print("KERNEL_OK")
</pallas_src>

<mosaic_0001>
module attributes {stable_mosaic.version = 11 : i64} {
  func.func @_mm_bias_act_kernel(%arg0: i32, %arg1: i32, %arg2: memref<200x256xbf16, #tpu.memory_space<vmem>>, %arg3: memref<256x128xbf16, #tpu.memory_space<vmem>>, %arg4: memref<1x128xf32, #tpu.memory_space<vmem>>, %arg5: memref<200x128xbf16, #tpu.memory_space<vmem>>) attributes {dimension_semantics = [#tpu.dimension_semantics<parallel>, #tpu.dimension_semantics<parallel>], iteration_bounds = array<i64: 1, 1>, scalar_prefetch = 0 : i64, scratch_operands = 0 : i64, tpu.core_type = #tpu.core_type<tc>, window_params = [{transform_indices = @transform_0, window_bounds = array<i64: 200, 256>}, {transform_indices = @transform_1, window_bounds = array<i64: 256, 128>}, {transform_indices = @transform_2, window_bounds = array<i64: 1, 128>}, {transform_indices = @transform_3, window_bounds = array<i64: 200, 128>}]} {
    %c0 = arith.constant 0 : index
    %c0_0 = arith.constant 0 : index
    %0 = vector.load %arg2[%c0, %c0_0] : memref<200x256xbf16, #tpu.memory_space<vmem>>, vector<200x256xbf16>
    %c0_1 = arith.constant 0 : index
    %c0_2 = arith.constant 0 : index
    %1 = vector.load %arg3[%c0_1, %c0_2] : memref<256x128xbf16, #tpu.memory_space<vmem>>, vector<256x128xbf16>
    %cst = arith.constant dense<0.000000e+00> : vector<200x128xf32>
    %2 = tpu.matmul %0, %1, %cst {dimension_numbers = #tpu.dot_dimension_numbers<[1], [0], [0], [1], [0, 0, 1, 1], [], []>} : vector<200x256xbf16>, vector<256x128xbf16>, vector<200x128xf32> -> vector<200x128xf32>
    %c0_3 = arith.constant 0 : index
    %c0_4 = arith.constant 0 : index
    %3 = vector.load %arg4[%c0_3, %c0_4] : memref<1x128xf32, #tpu.memory_space<vmem>>, vector<1x128xf32>
    %4 = vector.broadcast %3 : vector<1x128xf32> to vector<200x128xf32>
    %5 = arith.addf %2, %4 : vector<200x128xf32>
    %6 = arith.truncf %5 : vector<200x128xf32> to vector<200x128xbf16>
    %c0_5 = arith.constant 0 : index
    %c0_6 = arith.constant 0 : index
    %7 = vector.load %arg5[%c0_5, %c0_6] : memref<200x128xbf16, #tpu.memory_space<vmem>>, vector<200x128xbf16>
    tpu.vector_store %arg5[%c0_5, %c0_6], %6 {strides = array<i32>} : memref<200x128xbf16, #tpu.memory_space<vmem>>, vector<200x128xbf16>,
    return
  }
  func.func @transform_0(%arg0: i32, %arg1: i32) -> (i32, i32) {
    %c0_i32 = arith.constant 0 : i32
    %c0_i32_0 = arith.constant 0 : i32
    return %arg1, %c0_i32 : i32, i32
  }
  func.func @transform_1(%arg0: i32, %arg1: i32) -> (i32, i32) {
    %c0_i32 = arith.constant 0 : i32
    %c0_i32_0 = arith.constant 0 : i32
    return %c0_i32, %arg0 : i32, i32
  }
  func.func @transform_2(%arg0: i32, %arg1: i32) -> (i32, i32) {
    %c0_i32 = arith.constant 0 : i32
    %c0_i32_0 = arith.constant 0 : i32
    return %c0_i32, %arg0 : i32, i32
  }
  func.func @transform_3(%arg0: i32, %arg1: i32) -> (i32, i32) {
    %c0_i32 = arith.constant 0 : i32
    return %arg1, %arg0 : i32, i32
  }
}

</mosaic_0001>

<llo_original>
// kernel: tpu_custom_call.1
$region0: #{tpu_custom_call.1}
  #allocation0 [shape = 'u32[]', space=smem, size = 0x4, offset = 0x4, fixed_abs, tag = 'smem constant byte address 0x4 - core index']
  #allocation1 [shape = 'u32[144,128]{1,0:T(1,128)}', space=vmem, size = 0x12000, scoped, tag = 'internal scratch']
  %s0 = inlined_call_operand.hbm [shape: bf16[200,256], index: 0, kind: input, shape index: {}]
  %s1 = inlined_call_operand.hbm [shape: bf16[256,128], index: 1, kind: input, shape index: {}]
  %s2 = inlined_call_operand.vmem [shape: f32[1,128], index: 2, kind: input, shape index: {}]
  %s3 = inlined_call_operand.hbm [shape: bf16[200,128], index: 3, kind: output, shape index: {}]
  %s4 = sld [smem:[#allocation0]]
  $region30: #{tpu_custom_call.1} parent=0
    _
  %s6 = ssub.s32 1, %s4
  %s7 = scalar_select 0, %s6, %s4
  $region1: #{tpu_custom_call.1} parent=0
    #allocation2 [shape = 'u8[102400]{0}', space=vmem, size = 0x19000, scoped, tag = 'input window, operand 0, single buffered']
    #allocation3 [shape = 's32[1]{0}', space=sflag, size = 0x4, scoped, tag = 'scoped memory for tpu_custom_call.1']
    #allocation4 [shape = 's32[1]{0}', space=sflag, size = 0x4, scoped, tag = 'scoped memory for tpu_custom_call.1']
    #allocation5 [shape = 'u8[65536]{0}', space=vmem, size = 0x10000, scoped, tag = 'input window, operand 1, single buffered']
    #allocation6 [shape = 's32[1]{0}', space=sflag, size = 0x4, scoped, tag = 'scoped memory for tpu_custom_call.1']
    #allocation7 [shape = 'u8[51200]{0}', space=vmem, size = 0xc800, scoped, tag = 'output window, operand 0, single buffered']
    %8 = vsyncpa [#allocation3], 0
    %9 = vsyncpa [#allocation6], 0
    %10 = vsyncpa [#allocation4], 0
    // Predicated region
    $region2: #{tpu_custom_call.1} parent=1 // pred_check
      _
    $region3: #{tpu_custom_call.1} parent=1 // pred_check_branch
      %12 = sbr.rel (0) target = $region5
    $region4: #{tpu_custom_call.1} parent=1 // pred_region
      %s14 = ssub.s32 3200, 3200
      %15 = vsyncadd [#allocation3], %s14
      %s16 = sshll.u32 [#allocation2], 4
      %s17 = int_to_ptr.vmem [resolvable:$true] %s16
      %22 = dma.hbm_to_vmem [thread:$0]  %s0, 3200, %s17, [#allocation3], 128, 128, 8
    $region5: #{tpu_custom_call.1} parent=1 // pred_fallthru
      _
    // Predicated region
    $region6: #{tpu_custom_call.1} parent=1 // pred_check
      _
    $region7: #{tpu_custom_call.1} parent=1 // pred_check_branch
      %24 = sbr.rel (0) target = $region9
    $region8: #{tpu_custom_call.1} parent=1 // pred_region
      %s26 = ssub.s32 2048, 2048
      %27 = vsyncadd [#allocation6], %s26
      %s28 = sshll.u32 [#allocation5], 4
      %s29 = int_to_ptr.vmem [resolvable:$true] %s28
      %34 = dma.hbm_to_vmem [thread:$0]  %s1, 2048, %s29, [#allocation6], 64, 64, 4
    $region9: #{tpu_custom_call.1} parent=1 // pred_fallthru
      _
    // Predicated region
    $region10: #{tpu_custom_call.1} parent=1 // pred_check
      _
    $region11: #{tpu_custom_call.1} parent=1 // pred_check_branch
      %36 = sbr.rel (0) target = $region13
    $region12: #{tpu_custom_call.1} parent=1 // pred_region
      _
    $region13: #{tpu_custom_call.1} parent=1 // pred_fallthru
      _
    // Predicated region
    $region14: #{tpu_custom_call.1} parent=1 // pred_check
      _
    $region15: #{tpu_custom_call.1} parent=1 // pred_check_branch
      %38 = sbr.rel (0) target = $region17
    $region16: #{tpu_custom_call.1} parent=1 // pred_region
      %39 = dma.done [#allocation3], 3200
    $region17: #{tpu_custom_call.1} parent=1 // pred_fallthru
      _
    // Predicated region
    $region18: #{tpu_custom_call.1} parent=1 // pred_check
      _
    $region19: #{tpu_custom_call.1} parent=1 // pred_check_branch
      %41 = sbr.rel (0) target = $region21
    $region20: #{tpu_custom_call.1} parent=1 // pred_region
      %42 = dma.done [#allocation6], 2048
    $region21: #{tpu_custom_call.1} parent=1 // pred_fallthru
      _
    %v44 = vld [vmem:[#allocation2] sm:$0xff]
    %v45 = vld [vmem:[#allocation2 + $0x8] sm:$0xff]
    %v46 = vld [vmem:[#allocation2 + $0x10] sm:$0xff]
    %v47 = vld [vmem:[#allocation2 + $0x18] sm:$0xff]
    %v48 = vld [vmem:[#allocation2 + $0x20] sm:$0xff]
    %v49 = vld [vmem:[#allocation2 + $0x28] sm:$0xff]
    %v50 = vld [vmem:[#allocation2 + $0x30] sm:$0xff]
    %v51 = vld [vmem:[#allocation2 + $0x38] sm:$0xff]
    %v52 = vld [vmem:[#allocation2 + $0x40] sm:$0xff]
    %v53 = vld [vmem:[#allocation2 + $0x48] sm:$0xff]
    %v54 = vld [vmem:[#allocation2 + $0x50] sm:$0xff]
    %v55 = vld [vmem:[#allocation2 + $0x58] sm:$0xff]
    %v56 = vld [vmem:[#allocation2 + $0x60] sm:$0xff]
    %v57 = vld [vmem:[#allocation2 + $0x68] sm:$0xff]
    %v58 = vld [vmem:[#allocation2 + $0x70] sm:$0xff]
    %v59 = vld [vmem:[#allocation2 + $0x78] sm:$0xff]
    %v60 = vld [vmem:[#allocation2 + $0x80] sm:$0xff]
    %v61 = vld [vmem:[#allocation2 + $0x88] sm:$0xff]
    %v62 = vld [vmem:[#allocation2 + $0x90] sm:$0xff]
    %v63 = vld [vmem:[#allocation2 + $0x98] sm:$0xff]
    %v64 = vld [vmem:[#allocation2 + $0xa0] sm:$0xff]
    %v65 = vld [vmem:[#allocation2 + $0xa8] sm:$0xff]
    %v66 = vld [vmem:[#allocation2 + $0xb0] sm:$0xff]
    %v67 = vld [vmem:[#allocation2 + $0xb8] sm:$0xff]
    %v68 = vld [vmem:[#allocation2 + $0xc0] sm:$0xff]
    %v69 = vld [vmem:[#allocation5] sm:$0xf]
    %v70 = vld [vmem:[#allocation5 + $0x4] sm:$0xf]
    %v71 = vld [vmem:[#allocation5 + $0x8] sm:$0xf]
    %v72 = vld [vmem:[#allocation5 + $0xc] sm:$0xf]
    %v73 = vld [vmem:[#allocation5 + $0x10] sm:$0xf]
    %v74 = vld [vmem:[#allocation5 + $0x14] sm:$0xf]
    %v75 = vld [vmem:[#allocation5 + $0x18] sm:$0xf]
    %v76 = vld [vmem:[#allocation5 + $0x1c] sm:$0xf]
    %v77 = vld [vmem:[#allocation5 + $0x20] sm:$0xf]
    %v78 = vld [vmem:[#allocation5 + $0x24] sm:$0xf]
    %v79 = vld [vmem:[#allocation5 + $0x28] sm:$0xf]
    %v80 = vld [vmem:[#allocation5 + $0x2c] sm:$0xf]
    %v81 = vld [vmem:[#allocation5 + $0x30] sm:$0xf]
    %v82 = vld [vmem:[#allocation5 + $0x34] sm:$0xf]
    %v83 = vld [vmem:[#allocation5 + $0x38] sm:$0xf]
    %v84 = vld [vmem:[#allocation5 + $0x3c] sm:$0xf]
    %v85 = vld [vmem:[#allocation5 + $0x40] sm:$0xf]
    %v86 = vld [vmem:[#allocation5 + $0x44] sm:$0xf]
    %v87 = vld [vmem:[#allocation5 + $0x48] sm:$0xf]
    %v88 = vld [vmem:[#allocation5 + $0x4c] sm:$0xf]
    %v89 = vld [vmem:[#allocation5 + $0x50] sm:$0xf]
    %v90 = vld [vmem:[#allocation5 + $0x54] sm:$0xf]
    %v91 = vld [vmem:[#allocation5 + $0x58] sm:$0xf]
    %v92 = vld [vmem:[#allocation5 + $0x5c] sm:$0xf]
    %v93 = vld [vmem:[#allocation5 + $0x60] sm:$0xf]
    %v94 = vld [vmem:[#allocation5 + $0x64] sm:$0xf]
    %v95 = vld [vmem:[#allocation5 + $0x68] sm:$0xf]
    %v96 = vld [vmem:[#allocation5 + $0x6c] sm:$0xf]
    %v97 = vld [vmem:[#allocation5 + $0x70] sm:$0xf]
    %v98 = vld [vmem:[#allocation5 + $0x74] sm:$0xf]
    %v99 = vld [vmem:[#allocation5 + $0x78] sm:$0xf]
    %v100 = vld [vmem:[#allocation5 + $0x7c] sm:$0xf]
    %v101 = vld [vmem:[%s2] sm:$0x1]
    %v103 = vlaneseq
    %v104 = vshrl.u32 %v103, 7
    %v105 = vsub.s32 0, %v104
    %v106 = vrot.slane %v101, %v105
    %v133 = vunpack.c.l.b16 %v44
    %v134 = vunpack.c.h.b16 %v44
    %v135 = vunpack.c.l.b16 %v45
    %v136 = vunpack.c.h.b16 %v45
    %v137 = vunpack.c.l.b16 %v46
    %v138 = vunpack.c.h.b16 %v46
    %v139 = vunpack.c.l.b16 %v47
    %v140 = vunpack.c.h.b16 %v47
    %v141 = vunpack.c.l.b16 %v48
    %v142 = vunpack.c.h.b16 %v48
    %v143 = vunpack.c.l.b16 %v49
    %v144 = vunpack.c.h.b16 %v49
    %v145 = vunpack.c.l.b16 %v50
    %v146 = vunpack.c.h.b16 %v50
    %v147 = vunpack.c.l.b16 %v51
    %v148 = vunpack.c.h.b16 %v51
    %v149 = vunpack.c.l.b16 %v52
    %v150 = vunpack.c.h.b16 %v52
    %v151 = vunpack.c.l.b16 %v53
    %v152 = vunpack.c.h.b16 %v53
    %v153 = vunpack.c.l.b16 %v54
    %v154 = vunpack.c.h.b16 %v54
    %v155 = vunpack.c.l.b16 %v55
    %v156 = vunpack.c.h.b16 %v55
    %v157 = vunpack.c.l.b16 %v56
    %v158 = vunpack.c.h.b16 %v56
    %v159 = vunpack.c.l.b16 %v57
    %v160 = vunpack.c.h.b16 %v57
    %v161 = vunpack.c.l.b16 %v58
    %v162 = vunpack.c.h.b16 %v58
    %v163 = vunpack.c.l.b16 %v59
    %v164 = vunpack.c.h.b16 %v59
    %v165 = vunpack.c.l.b16 %v60
    %v166 = vunpack.c.h.b16 %v60
    %v167 = vunpack.c.l.b16 %v61
    %v168 = vunpack.c.h.b16 %v61
    %v169 = vunpack.c.l.b16 %v62
    %v170 = vunpack.c.h.b16 %v62
    %v171 = vunpack.c.l.b16 %v63
    %v172 = vunpack.c.h.b16 %v63
    %v173 = vunpack.c.l.b16 %v64
    %v174 = vunpack.c.h.b16 %v64
    %v175 = vunpack.c.l.b16 %v65
    %v176 = vunpack.c.h.b16 %v65
    %v177 = vunpack.c.l.b16 %v66
    %v178 = vunpack.c.h.b16 %v66
    %v179 = vunpack.c.l.b16 %v67
    %v180 = vunpack.c.h.b16 %v67
    %v181 = vunpack.c.l.b16 %v68
    %v182 = vunpack.c.h.b16 %v68
    %v183 = vpack.c.b16 %v135, %v133
    %v184 = vpack.c.b16 %v136, %v134
    %v185 = vpack.c.b16 %v139, %v137
    %v186 = vpack.c.b16 %v140, %v138
    %v187 = vpack.c.b16 %v143, %v141
    %v188 = vpack.c.b16 %v144, %v142
    %v189 = vpack.c.b16 %v147, %v145
    %v190 = vpack.c.b16 %v148, %v146
    %v191 = vpack.c.b16 %v151, %v149
    %v192 = vpack.c.b16 %v152, %v150
    %v193 = vpack.c.b16 %v155, %v153
    %v194 = vpack.c.b16 %v156, %v154
    %v195 = vpack.c.b16 %v159, %v157
    %v196 = vpack.c.b16 %v160, %v158
    %v197 = vpack.c.b16 %v163, %v161
    %v198 = vpack.c.b16 %v164, %v162
    %v199 = vpack.c.b16 %v167, %v165
    %v200 = vpack.c.b16 %v168, %v166
    %v201 = vpack.c.b16 %v171, %v169
    %v202 = vpack.c.b16 %v172, %v170
    %v203 = vpack.c.b16 %v175, %v173
    %v204 = vpack.c.b16 %v176, %v174
    %v205 = vpack.c.b16 %v179, %v177
    %v206 = vpack.c.b16 %v180, %v178
    %v207 = vpack.c.b16 %v181, %v181
    %v208 = vpack.c.b16 %v182, %v182
    %v267 = vunpack.c.l.b16 %v69
    %v268 = vunpack.c.l.b16 %v70
    %v269 = vunpack.c.l.b16 %v71
    %v270 = vunpack.c.l.b16 %v72
    %v271 = vunpack.c.l.b16 %v73
    %v272 = vunpack.c.l.b16 %v74
    %v273 = vunpack.c.l.b16 %v75
    %v274 = vunpack.c.l.b16 %v76
    %v275 = vunpack.c.l.b16 %v77
    %v276 = vunpack.c.l.b16 %v78
    %v277 = vunpack.c.l.b16 %v79
    %v278 = vunpack.c.l.b16 %v80
    %v279 = vunpack.c.l.b16 %v81
    %v280 = vunpack.c.l.b16 %v82
    %v281 = vunpack.c.l.b16 %v83
    %v282 = vunpack.c.l.b16 %v84
    %v283 = vunpack.c.l.b16 %v85
    %v284 = vunpack.c.l.b16 %v86
    %v285 = vunpack.c.l.b16 %v87
    %v286 = vunpack.c.l.b16 %v88
    %v287 = vunpack.c.l.b16 %v89
    %v288 = vunpack.c.l.b16 %v90
    %v289 = vunpack.c.l.b16 %v91
    %v290 = vunpack.c.l.b16 %v92
    %v291 = vunpack.c.l.b16 %v93
    %v292 = vunpack.c.l.b16 %v94
    %v293 = vunpack.c.l.b16 %v95
    %v294 = vunpack.c.l.b16 %v96
    %v295 = vunpack.c.l.b16 %v97
    %v296 = vunpack.c.l.b16 %v98
    %v297 = vunpack.c.l.b16 %v99
    %v298 = vunpack.c.l.b16 %v100
    %v299 = vpack.c.b16 %v268, %v267
    %v300 = vpack.c.b16 %v270, %v269
    %v301 = vpack.c.b16 %v272, %v271
    %v302 = vpack.c.b16 %v274, %v273
    %v303 = vpack.c.b16 %v276, %v275
    %v304 = vpack.c.b16 %v278, %v277
    %v305 = vpack.c.b16 %v280, %v279
    %v306 = vpack.c.b16 %v282, %v281
    %v307 = vpack.c.b16 %v284, %v283
    %v308 = vpack.c.b16 %v286, %v285
    %v309 = vpack.c.b16 %v288, %v287
    %v310 = vpack.c.b16 %v290, %v289
    %v311 = vpack.c.b16 %v292, %v291
    %v312 = vpack.c.b16 %v294, %v293
    %v313 = vpack.c.b16 %v296, %v295
    %v314 = vpack.c.b16 %v298, %v297
    %331 = vmatprep.subr.bf16.mxu0 0
    %332 = vmatpush1.bf16.msra.mxu0 %v306
    %333 = vmatprep.subr.bf16.mxu0 0
    %334 = vmatpush1.bf16.msra.mxu0 %v305
    %335 = vmatprep.subr.bf16.mxu0 0
    %336 = vmatpush1.bf16.msra.mxu0 %v304
    %337 = vmatprep.subr.bf16.mxu0 0
    %338 = vmatpush1.bf16.msra.mxu0 %v303
    %339 = vmatprep.subr.bf16.mxu0 0
    %340 = vmatpush1.bf16.msra.mxu0 %v302
    %341 = vmatprep.subr.bf16.mxu0 0
    %342 = vmatpush1.bf16.msra.mxu0 %v301
    %343 = vmatprep.subr.bf16.mxu0 0
    %344 = vmatpush1.bf16.msra.mxu0 %v300
    %345 = vmatprep.subr.bf16.mxu0 0
    %346 = vmatpush1.bf16.msra.mxu0 %v299
    %347 = vmatprep.subr.bf16.mxu0 0
    %348 = vmatpush2.bf16.msra.mxu0 %v314
    %349 = vmatprep.subr.bf16.mxu0 0
    %350 = vmatpush2.bf16.msra.mxu0 %v313
    %351 = vmatprep.subr.bf16.mxu0 0
    %352 = vmatpush2.bf16.msra.mxu0 %v312
    %353 = vmatprep.subr.bf16.mxu0 0
    %354 = vmatpush2.bf16.msra.mxu0 %v311
    %355 = vmatprep.subr.bf16.mxu0 0
    %356 = vmatpush2.bf16.msra.mxu0 %v310
    %357 = vmatprep.subr.bf16.mxu0 0
    %358 = vmatpush2.bf16.msra.mxu0 %v309
    %359 = vmatprep.subr.bf16.mxu0 0
    %360 = vmatpush2.bf16.msra.mxu0 %v308
    %361 = vmatprep.subr.bf16.mxu0 0
    %362 = vmatpush2.bf16.msra.mxu0 %v307
    %363 = vmatprep.mubr.bf16.mxu0 %v184
    %364 = vmatmul.mubr.bf16.gmra.mxu0 %v183
    %v365 = vpop.f32.mrf.mxu0
    %v366 = vadd.f32 %v106, %v365
    %v367 = vpop.f32.mrf.mxu0
    %v368 = vpop.f32.mrf.mxu0
    %v369 = vadd.f32 %v106, %v368
    %v370 = vpop.f32.mrf.mxu0
    %371 = vmatprep.mubr.bf16.mxu0 %v186
    %372 = vmatmul.mubr.bf16.gmra.mxu0 %v185
    %v373 = vpop.f32.mrf.mxu0
    %v374 = vadd.f32 %v106, %v373
    %v375 = vpop.f32.mrf.mxu0
    %v376 = vpop.f32.mrf.mxu0
    %v377 = vadd.f32 %v106, %v376
    %v378 = vpop.f32.mrf.mxu0
    %379 = vmatprep.mubr.bf16.mxu0 %v188
    %380 = vmatmul.mubr.bf16.gmra.mxu0 %v187
    %v381 = vpop.f32.mrf.mxu0
    %v382 = vadd.f32 %v106, %v381
    %v383 = vpop.f32.mrf.mxu0
    %v384 = vpop.f32.mrf.mxu0
    %v385 = vadd.f32 %v106, %v384
    %v386 = vpop.f32.mrf.mxu0
    %387 = vmatprep.mubr.bf16.mxu0 %v190
    %388 = vmatmul.mubr.bf16.gmra.mxu0 %v189
    %v389 = vpop.f32.mrf.mxu0
    %v390 = vadd.f32 %v106, %v389
    %v391 = vpop.f32.mrf.mxu0
    %v392 = vpop.f32.mrf.mxu0
    %v393 = vadd.f32 %v106, %v392
    %v394 = vpop.f32.mrf.mxu0
    %395 = vmatprep.mubr.bf16.mxu0 %v192
    %396 = vmatmul.mubr.bf16.gmra.mxu0 %v191
    %v397 = vpop.f32.mrf.mxu0
    %v398 = vadd.f32 %v106, %v397
    %v399 = vpop.f32.mrf.mxu0
    %v400 = vpop.f32.mrf.mxu0
    %v401 = vadd.f32 %v106, %v400
    %v402 = vpop.f32.mrf.mxu0
    %403 = vmatprep.mubr.bf16.mxu0 %v194
    %404 = vmatmul.mubr.bf16.gmra.mxu0 %v193
    %v405 = vpop.f32.mrf.mxu0
    %v406 = vadd.f32 %v106, %v405
    %v407 = vpop.f32.mrf.mxu0
    %v408 = vpop.f32.mrf.mxu0
    %v409 = vadd.f32 %v106, %v408
    %v410 = vpop.f32.mrf.mxu0
    %411 = vmatprep.mubr.bf16.mxu0 %v196
    %412 = vmatmul.mubr.bf16.gmra.mxu0 %v195
    %v413 = vpop.f32.mrf.mxu0
    %v414 = vadd.f32 %v106, %v413
    %v415 = vpop.f32.mrf.mxu0
    %v416 = vpop.f32.mrf.mxu0
    %v417 = vadd.f32 %v106, %v416
    %v418 = vpop.f32.mrf.mxu0
    %419 = vmatprep.mubr.bf16.mxu0 %v198
    %420 = vmatmul.mubr.bf16.gmra.mxu0 %v197
    %v421 = vpop.f32.mrf.mxu0
    %v422 = vadd.f32 %v106, %v421
    %v423 = vpop.f32.mrf.mxu0
    %v424 = vpop.f32.mrf.mxu0
    %v425 = vadd.f32 %v106, %v424
    %v426 = vpop.f32.mrf.mxu0
    %427 = vmatprep.mubr.bf16.mxu0 %v200
    %428 = vmatmul.mubr.bf16.gmra.mxu0 %v199
    %v429 = vpop.f32.mrf.mxu0
    %v430 = vadd.f32 %v106, %v429
    %v431 = vpop.f32.mrf.mxu0
    %v432 = vpop.f32.mrf.mxu0
    %v433 = vadd.f32 %v106, %v432
    %v434 = vpop.f32.mrf.mxu0
    %435 = vmatprep.mubr.bf16.mxu0 %v202
    %436 = vmatmul.mubr.bf16.gmra.mxu0 %v201
    %v437 = vpop.f32.mrf.mxu0
    %v438 = vadd.f32 %v106, %v437
    %v439 = vpop.f32.mrf.mxu0
    %v440 = vpop.f32.mrf.mxu0
    %v441 = vadd.f32 %v106, %v440
    %v442 = vpop.f32.mrf.mxu0
    %443 = vmatprep.mubr.bf16.mxu0 %v204
    %444 = vmatmul.mubr.bf16.gmra.mxu0 %v203
    %v445 = vpop.f32.mrf.mxu0
    %v446 = vadd.f32 %v106, %v445
    %v447 = vpop.f32.mrf.mxu0
    %v448 = vpop.f32.mrf.mxu0
    %v449 = vadd.f32 %v106, %v448
    %v450 = vpop.f32.mrf.mxu0
    %451 = vmatprep.mubr.bf16.mxu0 %v206
    %452 = vmatmul.mubr.bf16.gmra.mxu0 %v205
    %v453 = vpop.f32.mrf.mxu0
    %v454 = vadd.f32 %v106, %v453
    %v455 = vpop.f32.mrf.mxu0
    %v456 = vpop.f32.mrf.mxu0
    %v457 = vadd.f32 %v106, %v456
    %v458 = vpop.f32.mrf.mxu0
    %459 = vmatprep.mubr.bf16.mxu0 %v208
    %460 = vmatmul.mubr.bf16.gmra.mxu0 %v207
    %v461 = vpop.f32.mrf.mxu0
    %v462 = vadd.f32 %v106, %v461
    %v463 = vpop.f32.mrf.mxu0
    %v464 = vpop.f32.mrf.mxu0
    %v465 = vpop.f32.mrf.mxu0
    %466 = vdwg.mxu0
    %v467 = vpack.c.bf16 %v369, %v366
    %v468 = vpack.c.bf16 %v377, %v374
    %v469 = vpack.c.bf16 %v385, %v382
    %v470 = vpack.c.bf16 %v393, %v390
    %v471 = vpack.c.bf16 %v401, %v398
    %v472 = vpack.c.bf16 %v409, %v406
    %v473 = vpack.c.bf16 %v417, %v414
    %v474 = vpack.c.bf16 %v425, %v422
    %v475 = vpack.c.bf16 %v433, %v430
    %v476 = vpack.c.bf16 %v441, %v438
    %v477 = vpack.c.bf16 %v449, %v446
    %v478 = vpack.c.bf16 %v457, %v454
    %v479 = vpack.c.bf16 %v462, %v462
    %v493 = vunpack.c.l.b16 %v467
    %v494 = vunpack.c.h.b16 %v467
    %v495 = vunpack.c.l.b16 %v468
    %v496 = vunpack.c.h.b16 %v468
    %v497 = vunpack.c.l.b16 %v469
    %v498 = vunpack.c.h.b16 %v469
    %v499 = vunpack.c.l.b16 %v470
    %v500 = vunpack.c.h.b16 %v470
    %v501 = vunpack.c.l.b16 %v471
    %v502 = vunpack.c.h.b16 %v471
    %v503 = vunpack.c.l.b16 %v472
    %v504 = vunpack.c.h.b16 %v472
    %v505 = vunpack.c.l.b16 %v473
    %v506 = vunpack.c.h.b16 %v473
    %v507 = vunpack.c.l.b16 %v474
    %v508 = vunpack.c.h.b16 %v474
    %v509 = vunpack.c.l.b16 %v475
    %v510 = vunpack.c.h.b16 %v475
    %v511 = vunpack.c.l.b16 %v476
    %v512 = vunpack.c.h.b16 %v476
    %v513 = vunpack.c.l.b16 %v477
    %v514 = vunpack.c.h.b16 %v477
    %v515 = vunpack.c.l.b16 %v478
    %v516 = vunpack.c.h.b16 %v478
    %v517 = vunpack.c.l.b16 %v479
    %v518 = vpack.c.b16 %v493, %v493
    %v519 = vpack.c.b16 %v494, %v494
    %v520 = vpack.c.b16 %v495, %v495
    %v521 = vpack.c.b16 %v496, %v496
    %v522 = vpack.c.b16 %v497, %v497
    %v523 = vpack.c.b16 %v498, %v498
    %v524 = vpack.c.b16 %v499, %v499
    %v525 = vpack.c.b16 %v500, %v500
    %v526 = vpack.c.b16 %v501, %v501
    %v527 = vpack.c.b16 %v502, %v502
    %v528 = vpack.c.b16 %v503, %v503
    %v529 = vpack.c.b16 %v504, %v504
    %v530 = vpack.c.b16 %v505, %v505
    %v531 = vpack.c.b16 %v506, %v506
    %v532 = vpack.c.b16 %v507, %v507
    %v533 = vpack.c.b16 %v508, %v508
    %v534 = vpack.c.b16 %v509, %v509
    %v535 = vpack.c.b16 %v510, %v510
    %v536 = vpack.c.b16 %v511, %v511
    %v537 = vpack.c.b16 %v512, %v512
    %v538 = vpack.c.b16 %v513, %v513
    %v539 = vpack.c.b16 %v514, %v514
    %v540 = vpack.c.b16 %v515, %v515
    %v541 = vpack.c.b16 %v516, %v516
    %v542 = vpack.c.b16 %v517, %v517
    %568 = vst [vmem:[#allocation7] sm:$0xf] %v518
    %569 = vst [vmem:[#allocation7 + $0x4] sm:$0xf] %v519
    %570 = vst [vmem:[#allocation7 + $0x8] sm:$0xf] %v520
    %571 = vst [vmem:[#allocation7 + $0xc] sm:$0xf] %v521
    %572 = vst [vmem:[#allocation7 + $0x10] sm:$0xf] %v522
    %573 = vst [vmem:[#allocation7 + $0x14] sm:$0xf] %v523
    %574 = vst [vmem:[#allocation7 + $0x18] sm:$0xf] %v524
    %575 = vst [vmem:[#allocation7 + $0x1c] sm:$0xf] %v525
    %576 = vst [vmem:[#allocation7 + $0x20] sm:$0xf] %v526
    %577 = vst [vmem:[#allocation7 + $0x24] sm:$0xf] %v527
    %578 = vst [vmem:[#allocation7 + $0x28] sm:$0xf] %v528
    %579 = vst [vmem:[#allocation7 + $0x2c] sm:$0xf] %v529
    %580 = vst [vmem:[#allocation7 + $0x30] sm:$0xf] %v530
    %581 = vst [vmem:[#allocation7 + $0x34] sm:$0xf] %v531
    %582 = vst [vmem:[#allocation7 + $0x38] sm:$0xf] %v532
    %583 = vst [vmem:[#allocation7 + $0x3c] sm:$0xf] %v533
    %584 = vst [vmem:[#allocation7 + $0x40] sm:$0xf] %v534
    %585 = vst [vmem:[#allocation7 + $0x44] sm:$0xf] %v535
    %586 = vst [vmem:[#allocation7 + $0x48] sm:$0xf] %v536
    %587 = vst [vmem:[#allocation7 + $0x4c] sm:$0xf] %v537
    %588 = vst [vmem:[#allocation7 + $0x50] sm:$0xf] %v538
    %589 = vst [vmem:[#allocation7 + $0x54] sm:$0xf] %v539
    %590 = vst [vmem:[#allocation7 + $0x58] sm:$0xf] %v540
    %591 = vst [vmem:[#allocation7 + $0x5c] sm:$0xf] %v541
    %592 = vst [vmem:[#allocation7 + $0x60] sm:$0xf] %v542
    // Predicated region
    $region22: #{tpu_custom_call.1} parent=1 // pred_check
      _
    $region23: #{tpu_custom_call.1} parent=1 // pred_check_branch
      %594 = sbr.rel (0) target = $region25
    $region24: #{tpu_custom_call.1} parent=1 // pred_region
      %s596 = ssub.s32 1600, 1600
      %597 = vsyncadd [#allocation4], %s596
      %s598 = sshll.u32 [#allocation7], 4
      %s599 = int_to_ptr.vmem [resolvable:$true] %s598
      %604 = dma.vmem_to_hbm [thread:$0]  %s599, 1600, %s3, [#allocation4], 64, 64, 4
    $region25: #{tpu_custom_call.1} parent=1 // pred_fallthru
      _
    // Predicated region
    $region26: #{tpu_custom_call.1} parent=1 // pred_check
      _
    $region27: #{tpu_custom_call.1} parent=1 // pred_check_branch
      %606 = sbr.rel (0) target = $region29
    $region28: #{tpu_custom_call.1} parent=1 // pred_region
      %607 = dma.done [#allocation4], 1600
    $region29: #{tpu_custom_call.1} parent=1 // pred_fallthru
      _
    %608 = vsyncpa [#allocation3], 1
    %609 = vsyncpa [#allocation6], 1
    %610 = vsyncpa [#allocation4], 1

</llo_original>
